<compile_context>
chip_gen: v7x
topology: tpu7x:2x2x1
jax: 0.10.0
libtpu: 0.0.40
codegen_flags: <defaults>
</compile_context>

<pallas_src>
import functools

import jax
import jax.numpy as jnp
from jax.experimental import pallas as pl
from jax.experimental.pallas import tpu as pltpu

_EPS = 1e-6  # torch.nn.functional.pairwise_distance default eps


def _triplet_loss_kernel(a_ref, p_ref, n_ref, out_ref, *, margin, batch, tile_rows):
    pid = pl.program_id(0)
    nsteps = pl.num_programs(0)

    # Zero the resident (1,1) accumulator block on the first grid step.
    @pl.when(pid == 0)
    def _init():
        out_ref[...] = jnp.zeros_like(out_ref)

    a = a_ref[...].astype(jnp.float32)
    p = p_ref[...].astype(jnp.float32)
    n = n_ref[...].astype(jnp.float32)

    # pairwise_distance(x1, x2) = ||x1 - x2 + eps||_2   (p=2, eps=1e-6, per row)
    dist_pos = jnp.sqrt(jnp.sum((a - p + _EPS) ** 2, axis=-1, keepdims=True))  # (TB, 1)
    dist_neg = jnp.sqrt(jnp.sum((a - n + _EPS) ** 2, axis=-1, keepdims=True))  # (TB, 1)

    losses = jnp.maximum(dist_pos - dist_neg + margin, 0.0)  # relu(.)  (TB, 1)

    # Mask padded rows of a ragged last tile (garbage in padding may be NaN/Inf;
    # jnp.where selects 0.0 regardless).
    row_ids = pid * tile_rows + jax.lax.broadcasted_iota(jnp.int32, losses.shape, 0)
    losses = jnp.where(row_ids < batch, losses, 0.0)

    out_ref[...] += jnp.sum(losses, axis=(0, 1), keepdims=True)

    # Finalize: mean over the batch.
    @pl.when(pid == nsteps - 1)
    def _finalize():
        out_ref[...] = out_ref[...] / jnp.float32(batch)


def _pick_tile_rows(B, D, itemsize):
    # ~2 MiB per input tile -> 3 inputs x 2 pipeline buffers ~= 12 MiB buffered,
    # comfortably inside scoped VMEM on v5e/v6e/v7x.
    budget_bytes = 2 * 1024 * 1024
    tb = budget_bytes // max(1, D * itemsize)
    # Sublane-packing multiple: f32 -> 8, bf16/f16 -> 16, int8/fp8 -> 32.
    mult = max(8, 32 // itemsize)
    tb = max(mult, (tb // mult) * mult)
    return tb


def triplet_loss(anchor: jax.Array, positive: jax.Array, negative: jax.Array,
                 margin: float = 1.0, tile_rows: int | None = None) -> jax.Array:
    assert anchor.shape == positive.shape == negative.shape
    assert anchor.ndim == 2
    B, D = anchor.shape
    itemsize = jnp.dtype(anchor.dtype).itemsize

    if tile_rows is None:
        tile_rows = _pick_tile_rows(B, D, itemsize)
    if tile_rows >= B:
        # Single full-array block: exempt from the (8,128) divisibility constraint.
        tile_rows = B
    else:
        mult = max(8, 32 // itemsize)
        tile_rows = max(mult, (tile_rows // mult) * mult)

    grid = (pl.cdiv(B, tile_rows),)

    kernel = functools.partial(
        _triplet_loss_kernel, margin=float(margin), batch=B, tile_rows=tile_rows)

    in_spec = pl.BlockSpec((tile_rows, D), lambda i: (i, 0))

    out = pl.pallas_call(
        kernel,
        out_shape=jax.ShapeDtypeStruct((1, 1), jnp.float32),
        grid=grid,
        in_specs=[in_spec, in_spec, in_spec],
        # Same (0,0) block every step -> the scalar stays resident in VMEM across the
        # grid and is written back to HBM once at the end.
        out_specs=pl.BlockSpec((1, 1), lambda i: (0, 0)),
        compiler_params=pltpu.CompilerParams(
            dimension_semantics=("arbitrary",),   # reduction axis (accumulator)
            vmem_limit_bytes=32 * 1024 * 1024,
        ),
    )(anchor, positive, negative)  # native dtypes: no wrapper upcast / extra HBM bytes
    return out[0, 0]


def _reference(anchor, positive, negative, margin=1.0):
    a = anchor.astype(jnp.float32)
    p = positive.astype(jnp.float32)
    n = negative.astype(jnp.float32)
    dp = jnp.sqrt(jnp.sum((a - p + _EPS) ** 2, axis=-1))
    dn = jnp.sqrt(jnp.sum((a - n + _EPS) ** 2, axis=-1))
    return jnp.mean(jnp.maximum(dp - dn + margin, 0.0))


if __name__ == "__main__":
    key = jax.random.PRNGKey(0)
    k_a, k_p, k_n = jax.random.split(key, 3)

    # Small batch of embedding vectors; B=20 is deliberately NOT a multiple of the
    # forced tile size so the multi-step grid + ragged-tile masking path is exercised.
    B, D = 20, 32
    anchor = jax.random.normal(k_a, (B, D), dtype=jnp.float32)
    positive = jax.random.normal(k_p, (B, D), dtype=jnp.float32)
    negative = jax.random.normal(k_n, (B, D), dtype=jnp.float32)

    ref = jax.block_until_ready(_reference(anchor, positive, negative, margin=1.0))

    # 1) Default tiling (single full block here since B is tiny).
    loss_full = jax.block_until_ready(triplet_loss(anchor, positive, negative, margin=1.0))
    assert jnp.allclose(loss_full, ref, rtol=1e-5, atol=1e-5), (loss_full, ref)

    # 2) Forced small tiles -> grid of 3 steps with a ragged, masked last tile.
    loss_tiled = jax.block_until_ready(
        triplet_loss(anchor, positive, negative, margin=1.0, tile_rows=8))
    assert jnp.allclose(loss_tiled, ref, rtol=1e-5, atol=1e-5), (loss_tiled, ref)

    print("KERNEL_OK")
</pallas_src>

<mosaic_0001>
module attributes {stable_mosaic.version = 11 : i64} {
  func.func @_triplet_loss_kernel(%arg0: i32, %arg1: memref<20x32xf32, #tpu.memory_space<vmem>>, %arg2: memref<20x32xf32, #tpu.memory_space<vmem>>, %arg3: memref<20x32xf32, #tpu.memory_space<vmem>>, %arg4: memref<1x1xf32, #tpu.memory_space<vmem>>) attributes {dimension_semantics = [#tpu.dimension_semantics<arbitrary>], iteration_bounds = array<i64: 1>, scalar_prefetch = 0 : i64, scratch_operands = 0 : i64, tpu.core_type = #tpu.core_type<tc>, window_params = [{transform_indices = @transform_0, window_bounds = array<i64: 20, 32>}, {transform_indices = @transform_1, window_bounds = array<i64: 20, 32>}, {transform_indices = @transform_2, window_bounds = array<i64: 20, 32>}, {pipeline_mode = #tpu.pipeline_mode<synchronous>, transform_indices = @transform_3, window_bounds = array<i64: 1, 1>}]} {
    %c0_i32 = arith.constant 0 : i32
    %0 = arith.cmpi eq, %arg0, %c0_i32 : i32
    %1 = arith.extui %0 : i1 to i32
    %c0_i32_0 = arith.constant 0 : i32
    %2 = arith.cmpi ne, %1, %c0_i32_0 : i32
    scf.if %2 {
      %cst_20 = arith.constant 0.000000e+00 : f32
      %44 = vector.broadcast %cst_20 : f32 to vector<1x1xf32>
      %c0_21 = arith.constant 0 : index
      %c0_22 = arith.constant 0 : index
      %45 = vector.load %arg4[%c0_21, %c0_22] : memref<1x1xf32, #tpu.memory_space<vmem>>, vector<1x1xf32>
      tpu.vector_store %arg4[%c0_21, %c0_22], %44 {strides = array<i32>} : memref<1x1xf32, #tpu.memory_space<vmem>>, vector<1x1xf32>,
    } else {
    }
    %c0 = arith.constant 0 : index
    %c0_1 = arith.constant 0 : index
    %3 = vector.load %arg1[%c0, %c0_1] : memref<20x32xf32, #tpu.memory_space<vmem>>, vector<20x32xf32>
    %c0_2 = arith.constant 0 : index
    %c0_3 = arith.constant 0 : index
    %4 = vector.load %arg2[%c0_2, %c0_3] : memref<20x32xf32, #tpu.memory_space<vmem>>, vector<20x32xf32>
    %c0_4 = arith.constant 0 : index
    %c0_5 = arith.constant 0 : index
    %5 = vector.load %arg3[%c0_4, %c0_5] : memref<20x32xf32, #tpu.memory_space<vmem>>, vector<20x32xf32>
    %6 = arith.subf %3, %4 : vector<20x32xf32>
    %cst = arith.constant 9.99999997E-7 : f32
    %7 = vector.broadcast %cst : f32 to vector<20x32xf32>
    %8 = arith.addf %6, %7 : vector<20x32xf32>
    %9 = arith.mulf %8, %8 : vector<20x32xf32>
    %cst_6 = arith.constant dense<0.000000e+00> : vector<20xf32>
    %10 = vector.multi_reduction <add>, %9, %cst_6 [1] : vector<20x32xf32> to vector<20xf32>
    %11 = vector.shape_cast %10 : vector<20xf32> to vector<20x1xf32>
    %12 = math.sqrt %11 : vector<20x1xf32>
    %13 = arith.subf %3, %5 : vector<20x32xf32>
    %cst_7 = arith.constant 9.99999997E-7 : f32
    %14 = vector.broadcast %cst_7 : f32 to vector<20x32xf32>
    %15 = arith.addf %13, %14 : vector<20x32xf32>
    %16 = arith.mulf %15, %15 : vector<20x32xf32>
    %cst_8 = arith.constant dense<0.000000e+00> : vector<20xf32>
    %17 = vector.multi_reduction <add>, %16, %cst_8 [1] : vector<20x32xf32> to vector<20xf32>
    %18 = vector.shape_cast %17 : vector<20xf32> to vector<20x1xf32>
    %19 = math.sqrt %18 : vector<20x1xf32>
    %20 = arith.subf %12, %19 : vector<20x1xf32>
    %cst_9 = arith.constant 1.000000e+00 : f32
    %21 = vector.broadcast %cst_9 : f32 to vector<20x1xf32>
    %22 = arith.addf %20, %21 : vector<20x1xf32>
    %cst_10 = arith.constant 0.000000e+00 : f32
    %23 = vector.broadcast %cst_10 : f32 to vector<20x1xf32>
    %24 = arith.maximumf %22, %23 : vector<20x1xf32>
    %c20_i32 = arith.constant 20 : i32
    %25 = arith.muli %arg0, %c20_i32 : i32
    %26 = tpu.iota {dimensions = array<i32: 0>} : vector<20x1xi32>
    %27 = vector.broadcast %25 : i32 to vector<20x1xi32>
    %28 = arith.addi %27, %26 : vector<20x1xi32>
    %c20_i32_11 = arith.constant 20 : i32
    %29 = vector.broadcast %c20_i32_11 : i32 to vector<20x1xi32>
    %30 = arith.cmpi slt, %28, %29 : vector<20x1xi32>
    %cst_12 = arith.constant 0.000000e+00 : f32
    %31 = vector.broadcast %cst_12 : f32 to vector<20x1xf32>
    %32 = arith.select %30, %24, %31 : vector<20x1xi1>, vector<20x1xf32>
    %c0_13 = arith.constant 0 : index
    %c0_14 = arith.constant 0 : index
    %33 = vector.load %arg4[%c0_13, %c0_14] : memref<1x1xf32, #tpu.memory_space<vmem>>, vector<1x1xf32>
    %34 = vector.shape_cast %32 : vector<20x1xf32> to vector<1x20x1xf32>
    %cst_15 = arith.constant dense<0.000000e+00> : vector<1xf32>
    %35 = vector.multi_reduction <add>, %34, %cst_15 [1, 2] : vector<1x20x1xf32> to vector<1xf32>
    %36 = vector.shape_cast %35 : vector<1xf32> to vector<1x1x1xf32>
    %37 = vector.extract %36[0, 0, 0] : f32 from vector<1x1x1xf32>
    %38 = vector.broadcast %37 : f32 to vector<1x1xf32>
    %39 = arith.addf %33, %38 : vector<1x1xf32>
    %c0_16 = arith.constant 0 : index
    %c0_17 = arith.constant 0 : index
    %40 = vector.load %arg4[%c0_16, %c0_17] : memref<1x1xf32, #tpu.memory_space<vmem>>, vector<1x1xf32>
    tpu.vector_store %arg4[%c0_16, %c0_17], %39 {strides = array<i32>} : memref<1x1xf32, #tpu.memory_space<vmem>>, vector<1x1xf32>,
    %c0_i32_18 = arith.constant 0 : i32
    %41 = arith.cmpi eq, %arg0, %c0_i32_18 : i32
    %42 = arith.extui %41 : i1 to i32
    %c0_i32_19 = arith.constant 0 : i32
    %43 = arith.cmpi ne, %42, %c0_i32_19 : i32
    scf.if %43 {
      %c0_20 = arith.constant 0 : index
      %c0_21 = arith.constant 0 : index
      %44 = vector.load %arg4[%c0_20, %c0_21] : memref<1x1xf32, #tpu.memory_space<vmem>>, vector<1x1xf32>
      %cst_22 = arith.constant 2.000000e+01 : f32
      %45 = vector.broadcast %cst_22 : f32 to vector<1x1xf32>
      %46 = arith.divf %44, %45 : vector<1x1xf32>
      %c0_23 = arith.constant 0 : index
      %c0_24 = arith.constant 0 : index
      %47 = vector.load %arg4[%c0_23, %c0_24] : memref<1x1xf32, #tpu.memory_space<vmem>>, vector<1x1xf32>
      tpu.vector_store %arg4[%c0_23, %c0_24], %46 {strides = array<i32>} : memref<1x1xf32, #tpu.memory_space<vmem>>, vector<1x1xf32>,
    } else {
    }
    return
  }
  func.func @transform_0(%arg0: i32) -> (i32, i32) {
    %c0_i32 = arith.constant 0 : i32
    %c0_i32_0 = arith.constant 0 : i32
    return %arg0, %c0_i32 : i32, i32
  }
  func.func @transform_1(%arg0: i32) -> (i32, i32) {
    %c0_i32 = arith.constant 0 : i32
    %c0_i32_0 = arith.constant 0 : i32
    return %arg0, %c0_i32 : i32, i32
  }
  func.func @transform_2(%arg0: i32) -> (i32, i32) {
    %c0_i32 = arith.constant 0 : i32
    %c0_i32_0 = arith.constant 0 : i32
    return %arg0, %c0_i32 : i32, i32
  }
  func.func @transform_3(%arg0: i32) -> (i32, i32) {
    %c0_i32 = arith.constant 0 : i32
    %c0_i32_0 = arith.constant 0 : i32
    %c0_i32_1 = arith.constant 0 : i32
    return %c0_i32, %c0_i32_0 : i32, i32
  }
}

</mosaic_0001>

<llo_original>
// kernel: tpu_custom_call.1
$region0: #{tpu_custom_call.1}
  #allocation0 [shape = 'u32[]', space=smem, size = 0x4, offset = 0x4, fixed_abs, tag = 'smem constant byte address 0x4 - core index']
  #allocation1 [shape = 'u32[144,128]{1,0:T(1,128)}', space=vmem, size = 0x12000, scoped, tag = 'internal scratch']
  %s0 = inlined_call_operand.hbm [shape: f32[20,32], index: 0, kind: input, shape index: {}]
  %s1 = inlined_call_operand.hbm [shape: f32[20,32], index: 1, kind: input, shape index: {}]
  %s2 = inlined_call_operand.hbm [shape: f32[20,32], index: 2, kind: input, shape index: {}]
  %s3 = inlined_call_operand.hbm [shape: f32[1,1], index: 3, kind: output, shape index: {}]
  %s4 = sld [smem:[#allocation0]]
  $region42: #{tpu_custom_call.1} parent=0
    _
  %s6 = ssub.s32 1, %s4
  %s7 = scalar_select 0, %s6, %s4
  $region1: #{tpu_custom_call.1} parent=0
    #allocation2 [shape = 'u8[12288]{0}', space=vmem, size = 0x3000, scoped, tag = 'input window, operand 0, single buffered']
    #allocation3 [shape = 's32[1]{0}', space=sflag, size = 0x4, scoped, tag = 'scoped memory for tpu_custom_call.1']
    #allocation4 [shape = 's32[1]{0}', space=sflag, size = 0x4, scoped, tag = 'scoped memory for tpu_custom_call.1']
    #allocation5 [shape = 'u8[12288]{0}', space=vmem, size = 0x3000, scoped, tag = 'input window, operand 1, single buffered']
    #allocation6 [shape = 's32[1]{0}', space=sflag, size = 0x4, scoped, tag = 'scoped memory for tpu_custom_call.1']
    #allocation7 [shape = 'u8[12288]{0}', space=vmem, size = 0x3000, scoped, tag = 'input window, operand 2, single buffered']
    #allocation8 [shape = 'u8[512]{0}', space=vmem, size = 0x400, scoped, tag = 'output window, operand 0, single buffered']
    %8 = vsyncpa [#allocation3], 0
    %9 = vsyncpa [#allocation6], 0
    %10 = vsyncpa [#allocation4], 0
    // Predicated region
    $region2: #{tpu_custom_call.1} parent=1 // pred_check
      _
    $region3: #{tpu_custom_call.1} parent=1 // pred_check_branch
      %12 = sbr.rel (0) target = $region5
    $region4: #{tpu_custom_call.1} parent=1 // pred_region
      %s14 = ssub.s32 384, 384
      %15 = vsyncadd [#allocation3], %s14
      %s16 = sshll.u32 [#allocation2], 4
      %s17 = int_to_ptr.vmem [resolvable:$true] %s16
      %22 = dma.hbm_to_vmem [thread:$0]  %s0, 384, %s17, [#allocation3], 128, 128, 8
    $region5: #{tpu_custom_call.1} parent=1 // pred_fallthru
      _
    // Predicated region
    $region6: #{tpu_custom_call.1} parent=1 // pred_check
      _
    $region7: #{tpu_custom_call.1} parent=1 // pred_check_branch
      %24 = sbr.rel (0) target = $region9
    $region8: #{tpu_custom_call.1} parent=1 // pred_region
      %s26 = ssub.s32 384, 384
      %27 = vsyncadd [#allocation6], %s26
      %s28 = sshll.u32 [#allocation5], 4
      %s29 = int_to_ptr.vmem [resolvable:$true] %s28
      %34 = dma.hbm_to_vmem [thread:$0]  %s1, 384, %s29, [#allocation6], 128, 128, 8
    $region9: #{tpu_custom_call.1} parent=1 // pred_fallthru
      _
    // Predicated region
    $region10: #{tpu_custom_call.1} parent=1 // pred_check
      _
    $region11: #{tpu_custom_call.1} parent=1 // pred_check_branch
      %36 = sbr.rel (0) target = $region13
    $region12: #{tpu_custom_call.1} parent=1 // pred_region
      %s38 = ssub.s32 384, 384
      %39 = vsyncadd [#allocation6], %s38
      %s40 = sshll.u32 [#allocation7], 4
      %s41 = int_to_ptr.vmem [resolvable:$true] %s40
      %46 = dma.hbm_to_vmem [thread:$0]  %s2, 384, %s41, [#allocation6], 128, 128, 8
    $region13: #{tpu_custom_call.1} parent=1 // pred_fallthru
      _
    // Predicated region
    $region14: #{tpu_custom_call.1} parent=1 // pred_check
      _
    $region15: #{tpu_custom_call.1} parent=1 // pred_check_branch
      %48 = sbr.rel (0) target = $region17
    $region16: #{tpu_custom_call.1} parent=1 // pred_region
      %49 = dma.done [#allocation3], 384
    $region17: #{tpu_custom_call.1} parent=1 // pred_fallthru
      _
    // Predicated region
    $region18: #{tpu_custom_call.1} parent=1 // pred_check
      _
    $region19: #{tpu_custom_call.1} parent=1 // pred_check_branch
      %51 = sbr.rel (0) target = $region21
    $region20: #{tpu_custom_call.1} parent=1 // pred_region
      %52 = dma.done [#allocation6], 384
    $region21: #{tpu_custom_call.1} parent=1 // pred_fallthru
      _
    // Predicated region
    $region22: #{tpu_custom_call.1} parent=1 // pred_check
      _
    $region23: #{tpu_custom_call.1} parent=1 // pred_check_branch
      %54 = sbr.rel (0) target = $region25
    $region24: #{tpu_custom_call.1} parent=1 // pred_region
      %55 = dma.done [#allocation6], 384
    $region25: #{tpu_custom_call.1} parent=1 // pred_fallthru
      _
    %p56 = scmp.eq.s32.totalorder 0, 0
    // Predicated region
    $region26: #{tpu_custom_call.1} parent=1 // pred_check
      %p57 = pneg %p56
    $region27: #{tpu_custom_call.1} parent=1 // pred_check_branch
      %59 = sbr.rel (%p57) target = $region29
    $region28: #{tpu_custom_call.1} parent=1 // pred_region
      %vm60 = vcmask 0
      %61 = vst.msk [vmem:[#allocation8] sm:$0x1] %vm60, 0.0
    $region29: #{tpu_custom_call.1} parent=1 // pred_fallthru
      _
    %v62 = vld [vmem:[#allocation2] sm:$0xff]
    %v63 = vld [vmem:[#allocation2 + $0x8] sm:$0xff]
    %v64 = vld [vmem:[#allocation2 + $0x10] sm:$0xf]
    %v65 = vld [vmem:[#allocation5] sm:$0xff]
    %v66 = vld [vmem:[#allocation5 + $0x8] sm:$0xff]
    %v67 = vld [vmem:[#allocation5 + $0x10] sm:$0xf]
    %v68 = vld [vmem:[#allocation7] sm:$0xff]
    %v69 = vld [vmem:[#allocation7 + $0x8] sm:$0xff]
    %v70 = vld [vmem:[#allocation7 + $0x10] sm:$0xf]
    %v71 = vsub.f32 %v62, %v65
    %v72 = vsub.f32 %v63, %v66
    %v73 = vsub.f32 %v64, %v67
    %v74 = vadd.f32 %v71, 1e-06
    %v75 = vadd.f32 %v72, 1e-06
    %v76 = vadd.f32 %v73, 1e-06
    %v77 = vmul.f32 %v74, %v74
    %v78 = vmul.f32 %v75, %v75
    %v79 = vmul.f32 %v76, %v76
    %vm80 = vcmask 261120
    %v81 = vsel %vm80, %v77, 0.0
    %82 = vadd.xlane.f32.xlu0 %v81
    %v83 = vpop.xlane.xlu0 %82
    %v84 = vsel %vm80, %v78, 0.0
    %85 = vadd.xlane.f32.xlu0 %v84
    %v86 = vpop.xlane.xlu0 %85
    %vm87 = vcmask 257024
    %v88 = vsel %vm87, %v79, 0.0
    %89 = vadd.xlane.f32.xlu0 %v88
    %v90 = vpop.xlane.xlu0 %89
    %v91 = vrsqrt.pop %v83
    %v92 = vmul.f32 %v83, %v91
    %vm93 = vcmp.eq.f32.partialorder %v83, inf
    %v94 = vsel %vm93, %v83, %v92
    %vm95 = vcmp.eq.f32.partialorder %v83, 0.0
    %v96 = vand.u32 %v83, 2147483648
    %v97 = vsel %vm95, %v96, %v94
    %v98 = vrsqrt.pop %v86
    %v99 = vmul.f32 %v86, %v98
    %vm100 = vcmp.eq.f32.partialorder %v86, inf
    %v101 = vsel %vm100, %v86, %v99
    %vm102 = vcmp.eq.f32.partialorder %v86, 0.0
    %v103 = vand.u32 %v86, 2147483648
    %v104 = vsel %vm102, %v103, %v101
    %v105 = vrsqrt.pop %v90
    %v106 = vmul.f32 %v90, %v105
    %vm107 = vcmp.eq.f32.partialorder %v90, inf
    %v108 = vsel %vm107, %v90, %v106
    %vm109 = vcmp.eq.f32.partialorder %v90, 0.0
    %v110 = vand.u32 %v90, 2147483648
    %v111 = vsel %vm109, %v110, %v108
    %v112 = vsub.f32 %v62, %v68
    %v113 = vsub.f32 %v63, %v69
    %v114 = vsub.f32 %v64, %v70
    %v115 = vadd.f32 %v112, 1e-06
    %v116 = vadd.f32 %v113, 1e-06
    %v117 = vadd.f32 %v114, 1e-06
    %v118 = vmul.f32 %v115, %v115
    %v119 = vmul.f32 %v116, %v116
    %v120 = vmul.f32 %v117, %v117
    %v121 = vsel %vm80, %v118, 0.0
    %122 = vadd.xlane.f32.xlu0 %v121
    %v123 = vpop.xlane.xlu0 %122
    %v124 = vsel %vm80, %v119, 0.0
    %125 = vadd.xlane.f32.xlu0 %v124
    %v126 = vpop.xlane.xlu0 %125
    %v127 = vsel %vm87, %v120, 0.0
    %128 = vadd.xlane.f32.xlu0 %v127
    %v129 = vpop.xlane.xlu0 %128
    %v130 = vrsqrt.pop %v123
    %v131 = vmul.f32 %v123, %v130
    %vm132 = vcmp.eq.f32.partialorder %v123, inf
    %v133 = vsel %vm132, %v123, %v131
    %vm134 = vcmp.eq.f32.partialorder %v123, 0.0
    %v135 = vand.u32 %v123, 2147483648
    %v136 = vsel %vm134, %v135, %v133
    %v137 = vrsqrt.pop %v126
    %v138 = vmul.f32 %v126, %v137
    %vm139 = vcmp.eq.f32.partialorder %v126, inf
    %v140 = vsel %vm139, %v126, %v138
    %vm141 = vcmp.eq.f32.partialorder %v126, 0.0
    %v142 = vand.u32 %v126, 2147483648
    %v143 = vsel %vm141, %v142, %v140
    %v144 = vrsqrt.pop %v129
    %v145 = vmul.f32 %v129, %v144
    %vm146 = vcmp.eq.f32.partialorder %v129, inf
    %v147 = vsel %vm146, %v129, %v145
    %vm148 = vcmp.eq.f32.partialorder %v129, 0.0
    %v149 = vand.u32 %v129, 2147483648
    %v150 = vsel %vm148, %v149, %v147
    %v151 = vsub.f32 %v97, %v136
    %v152 = vsub.f32 %v104, %v143
    %v153 = vsub.f32 %v111, %v150
    %v154 = vadd.f32 %v151, 1.0
    %v155 = vadd.f32 %v152, 1.0
    %v156 = vadd.f32 %v153, 1.0
    %v157 = vmax.f32 %v154, 0.0
    %v158 = vmax.f32 %v155, 0.0
    %v159 = vmax.f32 %v156, 0.0
    %s160 = smul.u32 0, 20
    %v161 = vlaneseq
    %v162 = vshrl.u32 %v161, 7
    %v163 = vadd.s32 %v162, 8
    %v164 = vadd.s32 %v162, 16
    %v165 = vstv %s160
    %v166 = vadd.s32 %v165, %v162
    %v167 = vadd.s32 %v165, %v163
    %v168 = vadd.s32 %v165, %v164
    %vm169 = vcmp.lt.s32.totalorder %v166, 20
    %vm170 = vcmp.lt.s32.totalorder %v167, 20
    %vm171 = vcmp.lt.s32.totalorder %v168, 20
    %v172 = vsel %vm169, %v157, 0.0
    %v173 = vsel %vm170, %v158, 0.0
    %v174 = vsel %vm171, %v159, 0.0
    %v175 = vld [vmem:[#allocation8] sm:$0x1]
    %vm176 = vcmask 7168
    %v177 = vsel %vm176, %v172, 0.0
    %v178 = vsel %vm176, %v173, 0.0
    %v179 = vadd.f32 %v177, %v178
    %vm180 = vcmask 3072
    %v181 = vsel %vm180, %v174, 0.0
    %v182 = vadd.f32 %v179, %v181
    %183 = vadd.xlane.f32.xlu0 %v182
    %v184 = vpop.xlane.xlu0 %183
    %v185 = vrot.slane %v184, 4
    %v186 = vadd.f32 %v184, %v185
    %v187 = vrot.slane %v186, 2
    %v188 = vadd.f32 %v186, %v187
    %v189 = vrot.slane %v188, 1
    %v190 = vadd.f32 %v188, %v189
    %s191 = vtos %v190
    %v192 = vstv %s191
    %v193 = vadd.f32 %v175, %v192
    %vm194 = vcmask 0
    %195 = vst.msk [vmem:[#allocation8] sm:$0x1] %vm194, %v193
    // Predicated region
    $region30: #{tpu_custom_call.1} parent=1 // pred_check
      %p196 = pneg %p56
    $region31: #{tpu_custom_call.1} parent=1 // pred_check_branch
      %198 = sbr.rel (%p196) target = $region33
    $region32: #{tpu_custom_call.1} parent=1 // pred_region
      %v199 = vld [vmem:[#allocation8] sm:$0x1]
      %v200 = vrcp.pop 20.0
      %v201 = vmul.f32 %v199, %v200
      %202 = vst.msk [vmem:[#allocation8] sm:$0x1] %vm194, %v201
    $region33: #{tpu_custom_call.1} parent=1 // pred_fallthru
      _
    // Predicated region
    $region34: #{tpu_custom_call.1} parent=1 // pred_check
      _
    $region35: #{tpu_custom_call.1} parent=1 // pred_check_branch
      %204 = sbr.rel (0) target = $region37
    $region36: #{tpu_custom_call.1} parent=1 // pred_region
      %s206 = ssub.s32 16, 16
      %207 = vsyncadd [#allocation4], %s206
      %s209 = sshll.u32 [#allocation8], 4
      %s210 = int_to_ptr.vmem [resolvable:$true] %s209
      %212 = dma.vmem_to_hbm [thread:$0]  %s210, 16, %s3, [#allocation4]
    $region37: #{tpu_custom_call.1} parent=1 // pred_fallthru
      _
    // Predicated region
    $region38: #{tpu_custom_call.1} parent=1 // pred_check
      _
    $region39: #{tpu_custom_call.1} parent=1 // pred_check_branch
      %214 = sbr.rel (0) target = $region41
    $region40: #{tpu_custom_call.1} parent=1 // pred_region
      %215 = dma.done [#allocation4], 16
    $region41: #{tpu_custom_call.1} parent=1 // pred_fallthru
      _
    %216 = vsyncpa [#allocation3], 1
    %217 = vsyncpa [#allocation6], 1
    %218 = vsyncpa [#allocation4], 1

</llo_original>
